<compile_context>
chip_gen: v7x
topology: tpu7x:2x2x1
jax: 0.10.0
libtpu: 0.0.40
codegen_flags: <defaults>
</compile_context>

<pallas_src>
import jax
import jax.numpy as jnp
from jax.experimental import pallas as pl
from jax.experimental.pallas import tpu as pltpu

LN_EPS = 1e-5  # torch.nn.LayerNorm default


def _round_up(n, m):
    return ((n + m - 1) // m) * m


def _aa_vector_proj_kernel(x_ref, w1_ref, gamma_ref, beta_ref, w2_ref, o_ref):
    # x_ref: (tm, H) matmul dtype; w1_ref: (H, H); gamma/beta: (1, H) f32;
    # w2_ref: (H, OUT_PAD) (columns >=111 are zero); o_ref: (tm, OUT_PAD) f32.
    x = x_ref[...]

    # Linear(H -> H, bias=False); accumulate in f32 on the MXU.
    h = jnp.dot(x, w1_ref[...], preferred_element_type=jnp.float32)

    # SiLU in f32 (sigmoid's exp goes to the EUP).
    h = h * jax.nn.sigmoid(h)

    # LayerNorm over last dim: single-pass stats, biased variance (torch).
    inv_h = 1.0 / h.shape[-1]
    mean = jnp.sum(h, axis=-1, keepdims=True) * inv_h
    ex2 = jnp.sum(h * h, axis=-1, keepdims=True) * inv_h
    var = jnp.maximum(ex2 - mean * mean, 0.0)
    hn = (h - mean) * jax.lax.rsqrt(var + LN_EPS)
    hn = hn * gamma_ref[...] + beta_ref[...]

    # Linear(H -> 111, bias=False), lane-padded to OUT_PAD columns.
    o_ref[...] = jnp.dot(hn.astype(w2_ref.dtype), w2_ref[...],
                         preferred_element_type=jnp.float32).astype(o_ref.dtype)


def aa_vector_proj_output(x, v, params, *, tm=256, matmul_dtype=jnp.bfloat16,
                          single_buffer_weights=True):
    """x: [B, L, H] float32, v: unused. Returns [B, L, 111] float32."""
    del v  # unused, matches reference forward(x, v) -> f(x)
    B, L, H = x.shape
    M = B * L
    out_dim = params["w2_t"].shape[1]
    out_pad = _round_up(out_dim, 128)            # lane-dense output stores

    # Row tile: big enough to fill MXU rows, but never larger than padded M.
    tm = int(min(tm, max(8, _round_up(M, 8))))
    M_pad = _round_up(M, tm)

    x2d = x.reshape(M, H).astype(matmul_dtype)
    if M_pad != M:
        x2d = jnp.pad(x2d, ((0, M_pad - M), (0, 0)))

    w1 = params["w1_t"].astype(matmul_dtype)                 # (H, H)
    w2 = params["w2_t"].astype(matmul_dtype)                 # (H, out_dim)
    if out_pad != out_dim:
        w2 = jnp.pad(w2, ((0, 0), (0, out_pad - out_dim)))   # zero columns
    gamma = params["ln_gamma"].astype(jnp.float32)
    beta = params["ln_beta"].astype(jnp.float32)

    itm = jnp.dtype(matmul_dtype).itemsize

    def const_spec(shape):
        # Grid-invariant operand (weights / LN affine).
        if single_buffer_weights:
            return pl.BlockSpec(shape, lambda i: (0,) * len(shape),
                                pipeline_mode=pl.Buffered(1))
        return pl.BlockSpec(shape, lambda i: (0,) * len(shape))

    cost = pl.CostEstimate(
        flops=2 * M_pad * H * (H + out_pad),
        transcendentals=M_pad * H,
        bytes_accessed=(x2d.size * itm + w1.size * itm + w2.size * itm
                        + (gamma.size + beta.size) * 4 + M_pad * out_pad * 4))

    # VMEM hint: double-buffered activation tiles + (single/double) weights.
    wbufs = 1 if single_buffer_weights else 2
    vmem_bytes = (2 * tm * H * itm + 2 * tm * out_pad * 4
                  + wbufs * (H * H + H * out_pad) * itm
                  + 4 * H * 4 + (2 << 20))
    vmem_bytes = int(min(max(vmem_bytes, 16 << 20), 64 << 20))

    out = pl.pallas_call(
        _aa_vector_proj_kernel,
        out_shape=jax.ShapeDtypeStruct((M_pad, out_pad), jnp.float32),
        grid_spec=pltpu.PrefetchScalarGridSpec(
            num_scalar_prefetch=0,
            grid=(M_pad // tm,),
            in_specs=[
                pl.BlockSpec((tm, H), lambda i: (i, 0)),   # x tile
                const_spec((H, H)),                        # W1^T (full)
                const_spec((1, H)),                        # LN gamma
                const_spec((1, H)),                        # LN beta
                const_spec((H, out_pad)),                  # W2^T (lane-padded)
            ],
            out_specs=pl.BlockSpec((tm, out_pad), lambda i: (i, 0)),
        ),
        compiler_params=pltpu.CompilerParams(
            dimension_semantics=("parallel",),
            vmem_limit_bytes=vmem_bytes),
        cost_estimate=cost,
    )(x2d, w1, gamma, beta, w2)

    return out[:M, :out_dim].reshape(B, L, out_dim)


def init_params(key, hidden_channels, out_dim=111):
    """Deterministic synthetic parameters matching the module's shapes."""
    k1, k2 = jax.random.split(key, 2)
    # torch Linear weight shapes: W1 is (H, H), W2 is (out_dim, H); y = x @ W.T
    w1 = jax.random.normal(k1, (hidden_channels, hidden_channels),
                           jnp.float32) * (1.0 / jnp.sqrt(hidden_channels))
    w2 = jax.random.normal(k2, (out_dim, hidden_channels),
                           jnp.float32) * (1.0 / jnp.sqrt(hidden_channels))
    return {
        "w1_t": w1.T,                                        # (H, H)
        "w2_t": w2.T,                                        # (H, out_dim)
        "ln_gamma": jnp.ones((1, hidden_channels), jnp.float32),
        "ln_beta": jnp.zeros((1, hidden_channels), jnp.float32),
    }


def _reference(x, params):
    h = x @ params["w1_t"]
    h = h * jax.nn.sigmoid(h)
    mean = jnp.mean(h, axis=-1, keepdims=True)
    var = jnp.mean((h - mean) ** 2, axis=-1, keepdims=True)
    hn = (h - mean) / jnp.sqrt(var + LN_EPS)
    hn = hn * params["ln_gamma"][0] + params["ln_beta"][0]
    return hn @ params["w2_t"]


def _run(x, v, params, **kw):
    try:
        return jax.block_until_ready(aa_vector_proj_output(x, v, params, **kw))
    except Exception:
        # Fallback for jax versions where pl.Buffered(1) / pipeline_mode on an
        # auto-pipelined BlockSpec is unavailable: use default double-buffering.
        kw["single_buffer_weights"] = False
        return jax.block_until_ready(aa_vector_proj_output(x, v, params, **kw))


if __name__ == "__main__":
    key = jax.random.PRNGKey(0)
    B, L, H = 2, 8, 32  # small shapes; hidden_channels=32 (stand-in for 768)
    kx, kv, kp = jax.random.split(key, 3)

    x = jax.random.normal(kx, (B, L, H), jnp.float32)
    v = jax.random.normal(kv, (B, L, 3, H), jnp.float32)  # unused, like the module

    params = init_params(kp, H)
    ref = _reference(x, params)

    # f32-matmul path (v5e / precision-sensitive): tight tolerance.
    out_f32 = _run(x, v, params, matmul_dtype=jnp.float32)
    assert out_f32.shape == (B, L, 111), out_f32.shape
    assert jnp.allclose(out_f32, ref, atol=1e-4, rtol=1e-4), "f32 path mismatch"

    # bf16-matmul fast path (v6e/v7x default): relaxed tolerance vs f32 ref.
    out_bf16 = _run(x, v, params)
    assert out_bf16.shape == (B, L, 111), out_bf16.shape
    assert jnp.allclose(out_bf16, ref, atol=7.5e-2, rtol=7.5e-2), "bf16 path mismatch"

    print("KERNEL_OK")
</pallas_src>

<mosaic_0001>
module attributes {stable_mosaic.version = 11 : i64} {
  func.func @_aa_vector_proj_kernel(%arg0: i32, %arg1: memref<16x32xf32, #tpu.memory_space<vmem>>, %arg2: memref<32x32xf32, #tpu.memory_space<vmem>>, %arg3: memref<1x32xf32, #tpu.memory_space<vmem>>, %arg4: memref<1x32xf32, #tpu.memory_space<vmem>>, %arg5: memref<32x128xf32, #tpu.memory_space<vmem>>, %arg6: memref<16x128xf32, #tpu.memory_space<vmem>>) attributes {dimension_semantics = [#tpu.dimension_semantics<parallel>], iteration_bounds = array<i64: 1>, scalar_prefetch = 0 : i64, scratch_operands = 0 : i64, tpu.core_type = #tpu.core_type<tc>, window_params = [{transform_indices = @transform_0, window_bounds = array<i64: 16, 32>}, {pipeline_mode = #tpu.pipeline_mode<synchronous>, transform_indices = @transform_1, window_bounds = array<i64: 32, 32>}, {pipeline_mode = #tpu.pipeline_mode<synchronous>, transform_indices = @transform_2, window_bounds = array<i64: 1, 32>}, {pipeline_mode = #tpu.pipeline_mode<synchronous>, transform_indices = @transform_3, window_bounds = array<i64: 1, 32>}, {pipeline_mode = #tpu.pipeline_mode<synchronous>, transform_indices = @transform_4, window_bounds = array<i64: 32, 128>}, {transform_indices = @transform_5, window_bounds = array<i64: 16, 128>}]} {
    %c0 = arith.constant 0 : index
    %c0_0 = arith.constant 0 : index
    %0 = vector.load %arg1[%c0, %c0_0] : memref<16x32xf32, #tpu.memory_space<vmem>>, vector<16x32xf32>
    %c0_1 = arith.constant 0 : index
    %c0_2 = arith.constant 0 : index
    %1 = vector.load %arg2[%c0_1, %c0_2] : memref<32x32xf32, #tpu.memory_space<vmem>>, vector<32x32xf32>
    %cst = arith.constant dense<0.000000e+00> : vector<16x32xf32>
    %2 = tpu.matmul %0, %1, %cst {dimension_numbers = #tpu.dot_dimension_numbers<[1], [0], [0], [1], [0, 0, 1, 1], [], []>} : vector<16x32xf32>, vector<32x32xf32>, vector<16x32xf32> -> vector<16x32xf32>
    %3 = arith.negf %2 : vector<16x32xf32>
    %4 = math.exp %3 : vector<16x32xf32>
    %cst_3 = arith.constant 1.000000e+00 : f32
    %5 = vector.broadcast %cst_3 : f32 to vector<16x32xf32>
    %6 = arith.addf %5, %4 : vector<16x32xf32>
    %7 = arith.divf %5, %6 : vector<16x32xf32>
    %8 = arith.mulf %2, %7 : vector<16x32xf32>
    %cst_4 = arith.constant dense<0.000000e+00> : vector<16xf32>
    %9 = vector.multi_reduction <add>, %8, %cst_4 [1] : vector<16x32xf32> to vector<16xf32>
    %10 = vector.shape_cast %9 : vector<16xf32> to vector<16x1xf32>
    %cst_5 = arith.constant 3.125000e-02 : f32
    %11 = vector.broadcast %cst_5 : f32 to vector<16x1xf32>
    %12 = arith.mulf %10, %11 : vector<16x1xf32>
    %13 = arith.mulf %8, %8 : vector<16x32xf32>
    %cst_6 = arith.constant dense<0.000000e+00> : vector<16xf32>
    %14 = vector.multi_reduction <add>, %13, %cst_6 [1] : vector<16x32xf32> to vector<16xf32>
    %15 = vector.shape_cast %14 : vector<16xf32> to vector<16x1xf32>
    %cst_7 = arith.constant 3.125000e-02 : f32
    %16 = vector.broadcast %cst_7 : f32 to vector<16x1xf32>
    %17 = arith.mulf %15, %16 : vector<16x1xf32>
    %18 = arith.mulf %12, %12 : vector<16x1xf32>
    %19 = arith.subf %17, %18 : vector<16x1xf32>
    %cst_8 = arith.constant 0.000000e+00 : f32
    %20 = vector.broadcast %cst_8 : f32 to vector<16x1xf32>
    %21 = arith.maximumf %19, %20 : vector<16x1xf32>
    %22 = vector.broadcast %12 : vector<16x1xf32> to vector<16x32xf32>
    %23 = arith.subf %8, %22 : vector<16x32xf32>
    %cst_9 = arith.constant 9.99999974E-6 : f32
    %24 = vector.broadcast %cst_9 : f32 to vector<16x1xf32>
    %25 = arith.addf %21, %24 : vector<16x1xf32>
    %26 = math.rsqrt %25 : vector<16x1xf32>
    %27 = vector.broadcast %26 : vector<16x1xf32> to vector<16x32xf32>
    %28 = arith.mulf %23, %27 : vector<16x32xf32>
    %c0_10 = arith.constant 0 : index
    %c0_11 = arith.constant 0 : index
    %29 = vector.load %arg3[%c0_10, %c0_11] : memref<1x32xf32, #tpu.memory_space<vmem>>, vector<1x32xf32>
    %30 = vector.broadcast %29 : vector<1x32xf32> to vector<16x32xf32>
    %31 = arith.mulf %28, %30 : vector<16x32xf32>
    %c0_12 = arith.constant 0 : index
    %c0_13 = arith.constant 0 : index
    %32 = vector.load %arg4[%c0_12, %c0_13] : memref<1x32xf32, #tpu.memory_space<vmem>>, vector<1x32xf32>
    %33 = vector.broadcast %32 : vector<1x32xf32> to vector<16x32xf32>
    %34 = arith.addf %31, %33 : vector<16x32xf32>
    %c0_14 = arith.constant 0 : index
    %c0_15 = arith.constant 0 : index
    %35 = vector.load %arg5[%c0_14, %c0_15] : memref<32x128xf32, #tpu.memory_space<vmem>>, vector<32x128xf32>
    %cst_16 = arith.constant dense<0.000000e+00> : vector<16x128xf32>
    %36 = tpu.matmul %34, %35, %cst_16 {dimension_numbers = #tpu.dot_dimension_numbers<[1], [0], [0], [1], [0, 0, 1, 1], [], []>} : vector<16x32xf32>, vector<32x128xf32>, vector<16x128xf32> -> vector<16x128xf32>
    %c0_17 = arith.constant 0 : index
    %c0_18 = arith.constant 0 : index
    %37 = vector.load %arg6[%c0_17, %c0_18] : memref<16x128xf32, #tpu.memory_space<vmem>>, vector<16x128xf32>
    tpu.vector_store %arg6[%c0_17, %c0_18], %36 {strides = array<i32>} : memref<16x128xf32, #tpu.memory_space<vmem>>, vector<16x128xf32>,
    return
  }
  func.func @transform_0(%arg0: i32) -> (i32, i32) {
    %c0_i32 = arith.constant 0 : i32
    %c0_i32_0 = arith.constant 0 : i32
    return %arg0, %c0_i32 : i32, i32
  }
  func.func @transform_1(%arg0: i32) -> (i32, i32) {
    %c0_i32 = arith.constant 0 : i32
    %c0_i32_0 = arith.constant 0 : i32
    %c0_i32_1 = arith.constant 0 : i32
    return %c0_i32, %c0_i32_0 : i32, i32
  }
  func.func @transform_2(%arg0: i32) -> (i32, i32) {
    %c0_i32 = arith.constant 0 : i32
    %c0_i32_0 = arith.constant 0 : i32
    %c0_i32_1 = arith.constant 0 : i32
    return %c0_i32, %c0_i32_0 : i32, i32
  }
  func.func @transform_3(%arg0: i32) -> (i32, i32) {
    %c0_i32 = arith.constant 0 : i32
    %c0_i32_0 = arith.constant 0 : i32
    %c0_i32_1 = arith.constant 0 : i32
    return %c0_i32, %c0_i32_0 : i32, i32
  }
  func.func @transform_4(%arg0: i32) -> (i32, i32) {
    %c0_i32 = arith.constant 0 : i32
    %c0_i32_0 = arith.constant 0 : i32
    %c0_i32_1 = arith.constant 0 : i32
    return %c0_i32, %c0_i32_0 : i32, i32
  }
  func.func @transform_5(%arg0: i32) -> (i32, i32) {
    %c0_i32 = arith.constant 0 : i32
    %c0_i32_0 = arith.constant 0 : i32
    return %arg0, %c0_i32 : i32, i32
  }
}

module attributes {stable_mosaic.version = 11 : i64} {
  func.func @_aa_vector_proj_kernel(%arg0: i32, %arg1: memref<16x32xf32, #tpu.memory_space<vmem>>, %arg2: memref<32x32xf32, #tpu.memory_space<vmem>>, %arg3: memref<1x32xf32, #tpu.memory_space<vmem>>, %arg4: memref<1x32xf32, #tpu.memory_space<vmem>>, %arg5: memref<32x128xf32, #tpu.memory_space<vmem>>, %arg6: memref<16x128xf32, #tpu.memory_space<vmem>>) attributes {dimension_semantics = [#tpu.dimension_semantics<parallel>], iteration_bounds = array<i64: 1>, scalar_prefetch = 0 : i64, scratch_operands = 0 : i64, tpu.core_type = #tpu.core_type<tc>, window_params = [{transform_indices = @transform_0, window_bounds = array<i64: 16, 32>}, {pipeline_mode = #tpu.pipeline_mode<synchronous>, transform_indices = @transform_1, window_bounds = array<i64: 32, 32>}, {pipeline_mode = #tpu.pipeline_mode<synchronous>, transform_indices = @transform_2, window_bounds = array<i64: 1, 32>}, {pipeline_mode = #tpu.pipeline_mode<synchronous>, transform_indices = @transform_3, window_bounds = array<i64: 1, 32>}, {pipeline_mode = #tpu.pipeline_mode<synchronous>, transform_indices = @transform_4, window_bounds = array<i64: 32, 128>}, {transform_indices = @transform_5, window_bounds = array<i64: 16, 128>}]} {
    %c0 = arith.constant 0 : index
    %c0_0 = arith.constant 0 : index
    %0 = vector.load %arg1[%c0, %c0_0] : memref<16x32xf32, #tpu.memory_space<vmem>>, vector<16x32xf32>
    %c0_1 = arith.constant 0 : index
    %c0_2 = arith.constant 0 : index
    %1 = vector.load %arg2[%c0_1, %c0_2] : memref<32x32xf32, #tpu.memory_space<vmem>>, vector<32x32xf32>
    %cst = arith.constant dense<0.000000e+00> : vector<16x32xf32>
    %2 = tpu.matmul %0, %1, %cst {dimension_numbers = #tpu.dot_dimension_numbers<[1], [0], [0], [1], [0, 0, 1, 1], [], []>} : vector<16x32xf32>, vector<32x32xf32>, vector<16x32xf32> -> vector<16x32xf32>
    %3 = arith.negf %2 : vector<16x32xf32>
    %4 = math.exp %3 : vector<16x32xf32>
    %cst_3 = arith.constant 1.000000e+00 : f32
    %5 = vector.broadcast %cst_3 : f32 to vector<16x32xf32>
    %6 = arith.addf %5, %4 : vector<16x32xf32>
    %7 = arith.divf %5, %6 : vector<16x32xf32>
    %8 = arith.mulf %2, %7 : vector<16x32xf32>
    %cst_4 = arith.constant dense<0.000000e+00> : vector<16xf32>
    %9 = vector.multi_reduction <add>, %8, %cst_4 [1] : vector<16x32xf32> to vector<16xf32>
    %10 = vector.shape_cast %9 : vector<16xf32> to vector<16x1xf32>
    %cst_5 = arith.constant 3.125000e-02 : f32
    %11 = vector.broadcast %cst_5 : f32 to vector<16x1xf32>
    %12 = arith.mulf %10, %11 : vector<16x1xf32>
    %13 = arith.mulf %8, %8 : vector<16x32xf32>
    %cst_6 = arith.constant dense<0.000000e+00> : vector<16xf32>
    %14 = vector.multi_reduction <add>, %13, %cst_6 [1] : vector<16x32xf32> to vector<16xf32>
    %15 = vector.shape_cast %14 : vector<16xf32> to vector<16x1xf32>
    %cst_7 = arith.constant 3.125000e-02 : f32
    %16 = vector.broadcast %cst_7 : f32 to vector<16x1xf32>
    %17 = arith.mulf %15, %16 : vector<16x1xf32>
    %18 = arith.mulf %12, %12 : vector<16x1xf32>
    %19 = arith.subf %17, %18 : vector<16x1xf32>
    %cst_8 = arith.constant 0.000000e+00 : f32
    %20 = vector.broadcast %cst_8 : f32 to vector<16x1xf32>
    %21 = arith.maximumf %19, %20 : vector<16x1xf32>
    %22 = vector.broadcast %12 : vector<16x1xf32> to vector<16x32xf32>
    %23 = arith.subf %8, %22 : vector<16x32xf32>
    %cst_9 = arith.constant 9.99999974E-6 : f32
    %24 = vector.broadcast %cst_9 : f32 to vector<16x1xf32>
    %25 = arith.addf %21, %24 : vector<16x1xf32>
    %26 = math.rsqrt %25 : vector<16x1xf32>
    %27 = vector.broadcast %26 : vector<16x1xf32> to vector<16x32xf32>
    %28 = arith.mulf %23, %27 : vector<16x32xf32>
    %c0_10 = arith.constant 0 : index
    %c0_11 = arith.constant 0 : index
    %29 = vector.load %arg3[%c0_10, %c0_11] : memref<1x32xf32, #tpu.memory_space<vmem>>, vector<1x32xf32>
    %30 = vector.broadcast %29 : vector<1x32xf32> to vector<16x32xf32>
    %31 = arith.mulf %28, %30 : vector<16x32xf32>
    %c0_12 = arith.constant 0 : index
    %c0_13 = arith.constant 0 : index
    %32 = vector.load %arg4[%c0_12, %c0_13] : memref<1x32xf32, #tpu.memory_space<vmem>>, vector<1x32xf32>
    %33 = vector.broadcast %32 : vector<1x32xf32> to vector<16x32xf32>
    %34 = arith.addf %31, %33 : vector<16x32xf32>
    %c0_14 = arith.constant 0 : index
    %c0_15 = arith.constant 0 : index
    %35 = vector.load %arg5[%c0_14, %c0_15] : memref<32x128xf32, #tpu.memory_space<vmem>>, vector<32x128xf32>
    %cst_16 = arith.constant dense<0.000000e+00> : vector<16x128xf32>
    %36 = tpu.matmul %34, %35, %cst_16 {dimension_numbers = #tpu.dot_dimension_numbers<[1], [0], [0], [1], [0, 0, 1, 1], [], []>} : vector<16x32xf32>, vector<32x128xf32>, vector<16x128xf32> -> vector<16x128xf32>
    %c0_17 = arith.constant 0 : index
    %c0_18 = arith.constant 0 : index
    %37 = vector.load %arg6[%c0_17, %c0_18] : memref<16x128xf32, #tpu.memory_space<vmem>>, vector<16x128xf32>
    tpu.vector_store %arg6[%c0_17, %c0_18], %36 {strides = array<i32>} : memref<16x128xf32, #tpu.memory_space<vmem>>, vector<16x128xf32>,
    return
  }
  func.func @transform_0(%arg0: i32) -> (i32, i32) {
    %c0_i32 = arith.constant 0 : i32
    %c0_i32_0 = arith.constant 0 : i32
    return %arg0, %c0_i32 : i32, i32
  }
  func.func @transform_1(%arg0: i32) -> (i32, i32) {
    %c0_i32 = arith.constant 0 : i32
    %c0_i32_0 = arith.constant 0 : i32
    %c0_i32_1 = arith.constant 0 : i32
    return %c0_i32, %c0_i32_0 : i32, i32
  }
  func.func @transform_2(%arg0: i32) -> (i32, i32) {
    %c0_i32 = arith.constant 0 : i32
    %c0_i32_0 = arith.constant 0 : i32
    %c0_i32_1 = arith.constant 0 : i32
    return %c0_i32, %c0_i32_0 : i32, i32
  }
  func.func @transform_3(%arg0: i32) -> (i32, i32) {
    %c0_i32 = arith.constant 0 : i32
    %c0_i32_0 = arith.constant 0 : i32
    %c0_i32_1 = arith.constant 0 : i32
    return %c0_i32, %c0_i32_0 : i32, i32
  }
  func.func @transform_4(%arg0: i32) -> (i32, i32) {
    %c0_i32 = arith.constant 0 : i32
    %c0_i32_0 = arith.constant 0 : i32
    %c0_i32_1 = arith.constant 0 : i32
    return %c0_i32, %c0_i32_0 : i32, i32
  }
  func.func @transform_5(%arg0: i32) -> (i32, i32) {
    %c0_i32 = arith.constant 0 : i32
    %c0_i32_0 = arith.constant 0 : i32
    return %arg0, %c0_i32 : i32, i32
  }
}

</mosaic_0001>

<llo_original>
// kernel: tpu_custom_call.1
$region0: #{tpu_custom_call.1}
  #allocation0 [shape = 'u32[]', space=smem, size = 0x4, offset = 0x4, fixed_abs, tag = 'smem constant byte address 0x4 - core index']
  #allocation1 [shape = 'u32[144,128]{1,0:T(1,128)}', space=vmem, size = 0x12000, scoped, tag = 'internal scratch']
  %s0 = inlined_call_operand.hbm [shape: f32[16,32], index: 0, kind: input, shape index: {}]
  %s1 = inlined_call_operand.hbm [shape: f32[32,32], index: 1, kind: input, shape index: {}]
  %s2 = inlined_call_operand.vmem [shape: f32[1,32], index: 2, kind: input, shape index: {}]
  %s3 = inlined_call_operand.vmem [shape: f32[1,32], index: 3, kind: input, shape index: {}]
  %s4 = inlined_call_operand.hbm [shape: f32[32,128], index: 4, kind: input, shape index: {}]
  %s5 = inlined_call_operand.hbm [shape: f32[16,128], index: 5, kind: output, shape index: {}]
  %s6 = sld [smem:[#allocation0]]
  $region42: #{tpu_custom_call.1} parent=0
    _
  %s8 = ssub.s32 1, %s6
  %s9 = scalar_select 0, %s8, %s6
  $region1: #{tpu_custom_call.1} parent=0
    #allocation2 [shape = 'u8[8192]{0}', space=vmem, size = 0x2000, scoped, tag = 'input window, operand 0, single buffered']
    #allocation3 [shape = 's32[1]{0}', space=sflag, size = 0x4, scoped, tag = 'scoped memory for tpu_custom_call.1']
    #allocation4 [shape = 's32[1]{0}', space=sflag, size = 0x4, scoped, tag = 'scoped memory for tpu_custom_call.1']
    #allocation5 [shape = 'u8[16384]{0}', space=vmem, size = 0x4000, scoped, tag = 'input window, operand 1, single buffered']
    #allocation6 [shape = 's32[1]{0}', space=sflag, size = 0x4, scoped, tag = 'scoped memory for tpu_custom_call.1']
    #allocation7 [shape = 'u8[16384]{0}', space=vmem, size = 0x4000, scoped, tag = 'input window, operand 4, single buffered']
    #allocation8 [shape = 'u8[8192]{0}', space=vmem, size = 0x2000, scoped, tag = 'output window, operand 0, single buffered']
    %10 = vsyncpa [#allocation3], 0
    %11 = vsyncpa [#allocation6], 0
    %12 = vsyncpa [#allocation4], 0
    // Predicated region
    $region2: #{tpu_custom_call.1} parent=1 // pred_check
      _
    $region3: #{tpu_custom_call.1} parent=1 // pred_check_branch
      %14 = sbr.rel (0) target = $region5
    $region4: #{tpu_custom_call.1} parent=1 // pred_region
      %s16 = ssub.s32 256, 256
      %17 = vsyncadd [#allocation3], %s16
      %s18 = sshll.u32 [#allocation2], 4
      %s19 = int_to_ptr.vmem [resolvable:$true] %s18
      %24 = dma.hbm_to_vmem [thread:$0]  %s0, 256, %s19, [#allocation3], 128, 128, 8
    $region5: #{tpu_custom_call.1} parent=1 // pred_fallthru
      _
    // Predicated region
    $region6: #{tpu_custom_call.1} parent=1 // pred_check
      _
    $region7: #{tpu_custom_call.1} parent=1 // pred_check_branch
      %26 = sbr.rel (0) target = $region9
    $region8: #{tpu_custom_call.1} parent=1 // pred_region
      %s28 = ssub.s32 512, 512
      %29 = vsyncadd [#allocation6], %s28
      %s30 = sshll.u32 [#allocation5], 4
      %s31 = int_to_ptr.vmem [resolvable:$true] %s30
      %36 = dma.hbm_to_vmem [thread:$0]  %s1, 512, %s31, [#allocation6], 128, 128, 8
    $region9: #{tpu_custom_call.1} parent=1 // pred_fallthru
      _
    // Predicated region
    $region10: #{tpu_custom_call.1} parent=1 // pred_check
      _
    $region11: #{tpu_custom_call.1} parent=1 // pred_check_branch
      %38 = sbr.rel (0) target = $region13
    $region12: #{tpu_custom_call.1} parent=1 // pred_region
      _
    $region13: #{tpu_custom_call.1} parent=1 // pred_fallthru
      _
    // Predicated region
    $region14: #{tpu_custom_call.1} parent=1 // pred_check
      _
    $region15: #{tpu_custom_call.1} parent=1 // pred_check_branch
      %40 = sbr.rel (0) target = $region17
    $region16: #{tpu_custom_call.1} parent=1 // pred_region
      _
    $region17: #{tpu_custom_call.1} parent=1 // pred_fallthru
      _
    // Predicated region
    $region18: #{tpu_custom_call.1} parent=1 // pred_check
      _
    $region19: #{tpu_custom_call.1} parent=1 // pred_check_branch
      %42 = sbr.rel (0) target = $region21
    $region20: #{tpu_custom_call.1} parent=1 // pred_region
      %s44 = ssub.s32 512, 512
      %45 = vsyncadd [#allocation6], %s44
      %s46 = sshll.u32 [#allocation7], 4
      %s47 = int_to_ptr.vmem [resolvable:$true] %s46
      %52 = dma.hbm_to_vmem [thread:$0]  %s4, 512, %s47, [#allocation6], 128, 128, 8
    $region21: #{tpu_custom_call.1} parent=1 // pred_fallthru
      _
    // Predicated region
    $region22: #{tpu_custom_call.1} parent=1 // pred_check
      _
    $region23: #{tpu_custom_call.1} parent=1 // pred_check_branch
      %54 = sbr.rel (0) target = $region25
    $region24: #{tpu_custom_call.1} parent=1 // pred_region
      %55 = dma.done [#allocation3], 256
    $region25: #{tpu_custom_call.1} parent=1 // pred_fallthru
      _
    // Predicated region
    $region26: #{tpu_custom_call.1} parent=1 // pred_check
      _
    $region27: #{tpu_custom_call.1} parent=1 // pred_check_branch
      %57 = sbr.rel (0) target = $region29
    $region28: #{tpu_custom_call.1} parent=1 // pred_region
      %58 = dma.done [#allocation6], 512
    $region29: #{tpu_custom_call.1} parent=1 // pred_fallthru
      _
    // Predicated region
    $region30: #{tpu_custom_call.1} parent=1 // pred_check
      _
    $region31: #{tpu_custom_call.1} parent=1 // pred_check_branch
      %60 = sbr.rel (0) target = $region33
    $region32: #{tpu_custom_call.1} parent=1 // pred_region
      %61 = dma.done [#allocation6], 512
    $region33: #{tpu_custom_call.1} parent=1 // pred_fallthru
      _
    %v62 = vld [vmem:[#allocation2] sm:$0xff]
    %v63 = vld [vmem:[#allocation2 + $0x8] sm:$0xff]
    %v64 = vld [vmem:[#allocation5] sm:$0xff]
    %v65 = vld [vmem:[#allocation5 + $0x8] sm:$0xff]
    %v66 = vld [vmem:[#allocation5 + $0x10] sm:$0xff]
    %v67 = vld [vmem:[#allocation5 + $0x18] sm:$0xff]
    %vm68 = vcmask 261120
    %v70 = vsel %vm68, %v62, 0
    %v73 = vsel %vm68, %v63, 0
    %75 = vmatprep.subr.mxu0 0.0
    %76 = vmatpush1.msra.mxu0 %v64
    %77 = vmatprep.subr.mxu0 0.0
    %78 = vmatpush1.msra.mxu0 %v65
    %79 = vmatprep.subr.mxu0 0.0
    %80 = vmatpush1.msra.mxu0 %v66
    %81 = vmatprep.subr.mxu0 0.0
    %82 = vmatpush1.msra.mxu0 %v67
    %83 = vmatprep.subr.mxu0 0.0
    %84 = vmatpush1.msra.mxu0 0.0
    %85 = vmatprep.subr.mxu0 0.0
    %86 = vmatpush1.msra.mxu0 0.0
    %87 = vmatprep.subr.mxu0 0.0
    %88 = vmatpush1.msra.mxu0 0.0
    %89 = vmatprep.subr.mxu0 0.0
    %90 = vmatpush1.msra.mxu0 0.0
    %91 = vmatprep.subr.mxu0 0.0
    %92 = vmatpush1.msra.mxu0 0.0
    %93 = vmatprep.subr.mxu0 0.0
    %94 = vmatpush1.msra.mxu0 0.0
    %95 = vmatprep.subr.mxu0 0.0
    %96 = vmatpush1.msra.mxu0 0.0
    %97 = vmatprep.subr.mxu0 0.0
    %98 = vmatpush1.msra.mxu0 0.0
    %99 = vmatprep.subr.mxu0 0.0
    %100 = vmatpush1.msra.mxu0 0.0
    %101 = vmatprep.subr.mxu0 0.0
    %102 = vmatpush1.msra.mxu0 0.0
    %103 = vmatprep.subr.mxu0 0.0
    %104 = vmatpush1.msra.mxu0 0.0
    %105 = vmatprep.subr.mxu0 0.0
    %106 = vmatpush1.msra.mxu0 0.0
    %107 = vmatprep.subr.mxu0 0.0
    %108 = vmatpush1.msra.mxu0 0.0
    %109 = vmatprep.subr.mxu0 0.0
    %110 = vmatpush1.msra.mxu0 0.0
    %111 = vmatprep.subr.mxu0 0.0
    %112 = vmatpush1.msra.mxu0 0.0
    %113 = vmatprep.subr.mxu0 0.0
    %114 = vmatpush1.msra.mxu0 0.0
    %115 = vmatprep.subr.mxu0 0.0
    %116 = vmatpush1.msra.mxu0 0.0
    %117 = vmatprep.subr.mxu0 0.0
    %118 = vmatpush1.msra.mxu0 0.0
    %119 = vmatprep.subr.mxu0 0.0
    %120 = vmatpush1.msra.mxu0 0.0
    %121 = vmatprep.subr.mxu0 0.0
    %122 = vmatpush1.msra.mxu0 0.0
    %123 = vmatprep.subr.mxu0 0.0
    %124 = vmatpush1.msra.mxu0 0.0
    %125 = vmatprep.subr.mxu0 0.0
    %126 = vmatpush1.msra.mxu0 0.0
    %127 = vmatprep.subr.mxu0 0.0
    %128 = vmatpush1.msra.mxu0 0.0
    %129 = vmatprep.subr.mxu0 0.0
    %130 = vmatpush1.msra.mxu0 0.0
    %131 = vmatprep.subr.mxu0 0.0
    %132 = vmatpush1.msra.mxu0 0.0
    %133 = vmatprep.subr.mxu0 0.0
    %134 = vmatpush1.msra.mxu0 0.0
    %135 = vmatprep.subr.mxu0 0.0
    %136 = vmatpush1.msra.mxu0 0.0
    %137 = vmatprep.subr.mxu0 0.0
    %138 = vmatpush1.msra.mxu0 0.0
    %139 = vmatprep.mubr.f32.mxu0 0.0
    %140 = vmatmul.mubr.f32.gmra.mrb[0].mxu0 %v70
    %v141 = vpop.f32.mrb[0].mxu0
    %v142 = vadd.f32 0.0, %v141
    %v143 = vpop.f32.mrb[0].mxu0
    %144 = vmatprep.mubr.f32.mxu0 0.0
    %145 = vmatmul.mubr.f32.gmra.mrb[0].mxu0 %v73
    %v146 = vpop.f32.mrb[0].mxu0
    %v147 = vadd.f32 0.0, %v146
    %v148 = vpop.f32.mrb[0].mxu0
    %149 = vdwg.mxu0
    %v150 = vxor.u32 %v142, 2147483648
    %v151 = vxor.u32 %v147, 2147483648
    %v152 = vmul.f32 %v150, 1.442695
    %v153 = vpow.pop %v152
    %v154 = vmul.f32 %v151, 1.442695
    %v155 = vpow.pop %v154
    %v156 = vadd.f32 %v153, 1.0
    %v157 = vadd.f32 %v155, 1.0
    %v158 = vrcp.pop %v156
    %v159 = vmul.f32 1.0, %v158
    %v160 = vrcp.pop %v157
    %v161 = vmul.f32 1.0, %v160
    %v162 = vmul.f32 %v142, %v159
    %v163 = vmul.f32 %v147, %v161
    %v164 = vsel %vm68, %v162, 0.0
    %165 = vadd.xlane.f32.xlu0 %v164
    %v166 = vpop.xlane.xlu0 %165
    %v167 = vsel %vm68, %v163, 0.0
    %168 = vadd.xlane.f32.xlu0 %v167
    %v169 = vpop.xlane.xlu0 %168
    %v170 = vmul.f32 %v166, 0.03125
    %v171 = vmul.f32 %v169, 0.03125
    %v172 = vmul.f32 %v162, %v162
    %v173 = vmul.f32 %v163, %v163
    %v174 = vsel %vm68, %v172, 0.0
    %175 = vadd.xlane.f32.xlu0 %v174
    %v176 = vpop.xlane.xlu0 %175
    %v177 = vsel %vm68, %v173, 0.0
    %178 = vadd.xlane.f32.xlu0 %v177
    %v179 = vpop.xlane.xlu0 %178
    %v180 = vmul.f32 %v176, 0.03125
    %v181 = vmul.f32 %v179, 0.03125
    %v182 = vmul.f32 %v170, %v170
    %v183 = vmul.f32 %v171, %v171
    %v184 = vsub.f32 %v180, %v182
    %v185 = vsub.f32 %v181, %v183
    %v186 = vmax.f32 %v184, 0.0
    %v187 = vmax.f32 %v185, 0.0
    %v188 = vsub.f32 %v162, %v170
    %v189 = vsub.f32 %v163, %v171
    %v190 = vadd.f32 %v186, 1e-05
    %v191 = vadd.f32 %v187, 1e-05
    %v192 = vrsqrt.pop %v190
    %v193 = vrsqrt.pop %v191
    %v194 = vmul.f32 %v188, %v192
    %v195 = vmul.f32 %v189, %v193
    %v196 = vld [vmem:[%s2] sm:$0x1]
    %v198 = vlaneseq
    %v199 = vshrl.u32 %v198, 7
    %v200 = vsub.s32 0, %v199
    %v201 = vrot.slane %v196, %v200
    %v203 = vmul.f32 %v194, %v201
    %v204 = vmul.f32 %v195, %v201
    %v205 = vld [vmem:[%s3] sm:$0x1]
    %v207 = vlaneseq
    %v208 = vshrl.u32 %v207, 7
    %v209 = vsub.s32 0, %v208
    %v210 = vrot.slane %v205, %v209
    %v212 = vadd.f32 %v203, %v210
    %v213 = vadd.f32 %v204, %v210
    %v214 = vld [vmem:[#allocation7] sm:$0xff]
    %v215 = vld [vmem:[#allocation7 + $0x8] sm:$0xff]
    %v216 = vld [vmem:[#allocation7 + $0x10] sm:$0xff]
    %v217 = vld [vmem:[#allocation7 + $0x18] sm:$0xff]
    %v219 = vsel %vm68, %v212, 0
    %v222 = vsel %vm68, %v213, 0
    %224 = vmatprep.subr.mxu0 0.0
    %225 = vmatpush1.msra.mxu0 %v214
    %226 = vmatprep.subr.mxu0 0.0
    %227 = vmatpush1.msra.mxu0 %v215
    %228 = vmatprep.subr.mxu0 0.0
    %229 = vmatpush1.msra.mxu0 %v216
    %230 = vmatprep.subr.mxu0 0.0
    %231 = vmatpush1.msra.mxu0 %v217
    %232 = vmatprep.subr.mxu0 0.0
    %233 = vmatpush1.msra.mxu0 0.0
    %234 = vmatprep.subr.mxu0 0.0
    %235 = vmatpush1.msra.mxu0 0.0
    %236 = vmatprep.subr.mxu0 0.0
    %237 = vmatpush1.msra.mxu0 0.0
    %238 = vmatprep.subr.mxu0 0.0
    %239 = vmatpush1.msra.mxu0 0.0
    %240 = vmatprep.subr.mxu0 0.0
    %241 = vmatpush1.msra.mxu0 0.0
    %242 = vmatprep.subr.mxu0 0.0
    %243 = vmatpush1.msra.mxu0 0.0
    %244 = vmatprep.subr.mxu0 0.0
    %245 = vmatpush1.msra.mxu0 0.0
    %246 = vmatprep.subr.mxu0 0.0
    %247 = vmatpush1.msra.mxu0 0.0
    %248 = vmatprep.subr.mxu0 0.0
    %249 = vmatpush1.msra.mxu0 0.0
    %250 = vmatprep.subr.mxu0 0.0
    %251 = vmatpush1.msra.mxu0 0.0
    %252 = vmatprep.subr.mxu0 0.0
    %253 = vmatpush1.msra.mxu0 0.0
    %254 = vmatprep.subr.mxu0 0.0
    %255 = vmatpush1.msra.mxu0 0.0
    %256 = vmatprep.subr.mxu0 0.0
    %257 = vmatpush1.msra.mxu0 0.0
    %258 = vmatprep.subr.mxu0 0.0
    %259 = vmatpush1.msra.mxu0 0.0
    %260 = vmatprep.subr.mxu0 0.0
    %261 = vmatpush1.msra.mxu0 0.0
    %262 = vmatprep.subr.mxu0 0.0
    %263 = vmatpush1.msra.mxu0 0.0
    %264 = vmatprep.subr.mxu0 0.0
    %265 = vmatpush1.msra.mxu0 0.0
    %266 = vmatprep.subr.mxu0 0.0
    %267 = vmatpush1.msra.mxu0 0.0
    %268 = vmatprep.subr.mxu0 0.0
    %269 = vmatpush1.msra.mxu0 0.0
    %270 = vmatprep.subr.mxu0 0.0
    %271 = vmatpush1.msra.mxu0 0.0
    %272 = vmatprep.subr.mxu0 0.0
    %273 = vmatpush1.msra.mxu0 0.0
    %274 = vmatprep.subr.mxu0 0.0
    %275 = vmatpush1.msra.mxu0 0.0
    %276 = vmatprep.subr.mxu0 0.0
    %277 = vmatpush1.msra.mxu0 0.0
    %278 = vmatprep.subr.mxu0 0.0
    %279 = vmatpush1.msra.mxu0 0.0
    %280 = vmatprep.subr.mxu0 0.0
    %281 = vmatpush1.msra.mxu0 0.0
    %282 = vmatprep.subr.mxu0 0.0
    %283 = vmatpush1.msra.mxu0 0.0
    %284 = vmatprep.subr.mxu0 0.0
    %285 = vmatpush1.msra.mxu0 0.0
    %286 = vmatprep.subr.mxu0 0.0
    %287 = vmatpush1.msra.mxu0 0.0
    %288 = vmatprep.mubr.f32.mxu0 0.0
    %289 = vmatmul.mubr.f32.gmra.mrb[0].mxu0 %v219
    %v290 = vpop.f32.mrb[0].mxu0
    %v291 = vadd.f32 0.0, %v290
    %v292 = vpop.f32.mrb[0].mxu0
    %293 = vmatprep.mubr.f32.mxu0 0.0
    %294 = vmatmul.mubr.f32.gmra.mrb[0].mxu0 %v222
    %v295 = vpop.f32.mrb[0].mxu0
    %v296 = vadd.f32 0.0, %v295
    %v297 = vpop.f32.mrb[0].mxu0
    %298 = vdwg.mxu0
    %299 = vst [vmem:[#allocation8] sm:$0xff] %v291
    %300 = vst [vmem:[#allocation8 + $0x8] sm:$0xff] %v296
    // Predicated region
    $region34: #{tpu_custom_call.1} parent=1 // pred_check
      _
    $region35: #{tpu_custom_call.1} parent=1 // pred_check_branch
      %302 = sbr.rel (0) target = $region37
    $region36: #{tpu_custom_call.1} parent=1 // pred_region
      %s304 = ssub.s32 256, 256
      %305 = vsyncadd [#allocation4], %s304
      %s306 = sshll.u32 [#allocation8], 4
      %s307 = int_to_ptr.vmem [resolvable:$true] %s306
      %312 = dma.vmem_to_hbm [thread:$0]  %s307, 256, %s5, [#allocation4], 128, 128, 8
    $region37: #{tpu_custom_call.1} parent=1 // pred_fallthru
      _
    // Predicated region
    $region38: #{tpu_custom_call.1} parent=1 // pred_check
      _
    $region39: #{tpu_custom_call.1} parent=1 // pred_check_branch
      %314 = sbr.rel (0) target = $region41
    $region40: #{tpu_custom_call.1} parent=1 // pred_region
      %315 = dma.done [#allocation4], 256
    $region41: #{tpu_custom_call.1} parent=1 // pred_fallthru
      _
    %316 = vsyncpa [#allocation3], 1
    %317 = vsyncpa [#allocation6], 1
    %318 = vsyncpa [#allocation4], 1

// kernel: tpu_custom_call.1
$region0: #{tpu_custom_call.1}
  #allocation0 [shape = 'u32[]', space=smem, size = 0x4, offset = 0x4, fixed_abs, tag = 'smem constant byte address 0x4 - core index']
  #allocation1 [shape = 'u32[144,128]{1,0:T(1,128)}', space=vmem, size = 0x12000, scoped, tag = 'internal scratch']
  %s0 = inlined_call_operand.hbm [shape: f32[16,32], index: 0, kind: input, shape index: {}]
  %s1 = inlined_call_operand.hbm [shape: f32[32,32], index: 1, kind: input, shape index: {}]
  %s2 = inlined_call_operand.vmem [shape: f32[1,32], index: 2, kind: input, shape index: {}]
  %s3 = inlined_call_operand.vmem [shape: f32[1,32], index: 3, kind: input, shape index: {}]
  %s4 = inlined_call_operand.hbm [shape: f32[32,128], index: 4, kind: input, shape index: {}]
  %s5 = inlined_call_operand.hbm [shape: f32[16,128], index: 5, kind: output, shape index: {}]
  %s6 = sld [smem:[#allocation0]]
  $region42: #{tpu_custom_call.1} parent=0
    _
  %s8 = ssub.s32 1, %s6
  %s9 = scalar_select 0, %s8, %s6
  $region1: #{tpu_custom_call.1} parent=0
    #allocation2 [shape = 'u8[8192]{0}', space=vmem, size = 0x2000, scoped, tag = 'input window, operand 0, single buffered']
    #allocation3 [shape = 's32[1]{0}', space=sflag, size = 0x4, scoped, tag = 'scoped memory for tpu_custom_call.1']
    #allocation4 [shape = 's32[1]{0}', space=sflag, size = 0x4, scoped, tag = 'scoped memory for tpu_custom_call.1']
    #allocation5 [shape = 'u8[16384]{0}', space=vmem, size = 0x4000, scoped, tag = 'input window, operand 1, single buffered']
    #allocation6 [shape = 's32[1]{0}', space=sflag, size = 0x4, scoped, tag = 'scoped memory for tpu_custom_call.1']
    #allocation7 [shape = 'u8[16384]{0}', space=vmem, size = 0x4000, scoped, tag = 'input window, operand 4, single buffered']
    #allocation8 [shape = 'u8[8192]{0}', space=vmem, size = 0x2000, scoped, tag = 'output window, operand 0, single buffered']
    %10 = vsyncpa [#allocation3], 0
    %11 = vsyncpa [#allocation6], 0
    %12 = vsyncpa [#allocation4], 0
    // Predicated region
    $region2: #{tpu_custom_call.1} parent=1 // pred_check
      _
    $region3: #{tpu_custom_call.1} parent=1 // pred_check_branch
      %14 = sbr.rel (0) target = $region5
    $region4: #{tpu_custom_call.1} parent=1 // pred_region
      %s16 = ssub.s32 256, 256
      %17 = vsyncadd [#allocation3], %s16
      %s18 = sshll.u32 [#allocation2], 4
      %s19 = int_to_ptr.vmem [resolvable:$true] %s18
      %24 = dma.hbm_to_vmem [thread:$0]  %s0, 256, %s19, [#allocation3], 128, 128, 8
    $region5: #{tpu_custom_call.1} parent=1 // pred_fallthru
      _
    // Predicated region
    $region6: #{tpu_custom_call.1} parent=1 // pred_check
      _
    $region7: #{tpu_custom_call.1} parent=1 // pred_check_branch
      %26 = sbr.rel (0) target = $region9
    $region8: #{tpu_custom_call.1} parent=1 // pred_region
      %s28 = ssub.s32 512, 512
      %29 = vsyncadd [#allocation6], %s28
      %s30 = sshll.u32 [#allocation5], 4
      %s31 = int_to_ptr.vmem [resolvable:$true] %s30
      %36 = dma.hbm_to_vmem [thread:$0]  %s1, 512, %s31, [#allocation6], 128, 128, 8
    $region9: #{tpu_custom_call.1} parent=1 // pred_fallthru
      _
    // Predicated region
    $region10: #{tpu_custom_call.1} parent=1 // pred_check
      _
    $region11: #{tpu_custom_call.1} parent=1 // pred_check_branch
      %38 = sbr.rel (0) target = $region13
    $region12: #{tpu_custom_call.1} parent=1 // pred_region
      _
    $region13: #{tpu_custom_call.1} parent=1 // pred_fallthru
      _
    // Predicated region
    $region14: #{tpu_custom_call.1} parent=1 // pred_check
      _
    $region15: #{tpu_custom_call.1} parent=1 // pred_check_branch
      %40 = sbr.rel (0) target = $region17
    $region16: #{tpu_custom_call.1} parent=1 // pred_region
      _
    $region17: #{tpu_custom_call.1} parent=1 // pred_fallthru
      _
    // Predicated region
    $region18: #{tpu_custom_call.1} parent=1 // pred_check
      _
    $region19: #{tpu_custom_call.1} parent=1 // pred_check_branch
      %42 = sbr.rel (0) target = $region21
    $region20: #{tpu_custom_call.1} parent=1 // pred_region
      %s44 = ssub.s32 512, 512
      %45 = vsyncadd [#allocation6], %s44
      %s46 = sshll.u32 [#allocation7], 4
      %s47 = int_to_ptr.vmem [resolvable:$true] %s46
      %52 = dma.hbm_to_vmem [thread:$0]  %s4, 512, %s47, [#allocation6], 128, 128, 8
    $region21: #{tpu_custom_call.1} parent=1 // pred_fallthru
      _
    // Predicated region
    $region22: #{tpu_custom_call.1} parent=1 // pred_check
      _
    $region23: #{tpu_custom_call.1} parent=1 // pred_check_branch
      %54 = sbr.rel (0) target = $region25
    $region24: #{tpu_custom_call.1} parent=1 // pred_region
      %55 = dma.done [#allocation3], 256
    $region25: #{tpu_custom_call.1} parent=1 // pred_fallthru
      _
    // Predicated region
    $region26: #{tpu_custom_call.1} parent=1 // pred_check
      _
    $region27: #{tpu_custom_call.1} parent=1 // pred_check_branch
      %57 = sbr.rel (0) target = $region29
    $region28: #{tpu_custom_call.1} parent=1 // pred_region
      %58 = dma.done [#allocation6], 512
    $region29: #{tpu_custom_call.1} parent=1 // pred_fallthru
      _
    // Predicated region
    $region30: #{tpu_custom_call.1} parent=1 // pred_check
      _
    $region31: #{tpu_custom_call.1} parent=1 // pred_check_branch
      %60 = sbr.rel (0) target = $region33
    $region32: #{tpu_custom_call.1} parent=1 // pred_region
      %61 = dma.done [#allocation6], 512
    $region33: #{tpu_custom_call.1} parent=1 // pred_fallthru
      _
    %v62 = vld [vmem:[#allocation2] sm:$0xff]
    %v63 = vld [vmem:[#allocation2 + $0x8] sm:$0xff]
    %v64 = vld [vmem:[#allocation5] sm:$0xff]
    %v65 = vld [vmem:[#allocation5 + $0x8] sm:$0xff]
    %v66 = vld [vmem:[#allocation5 + $0x10] sm:$0xff]
    %v67 = vld [vmem:[#allocation5 + $0x18] sm:$0xff]
    %vm68 = vcmask 261120
    %v70 = vsel %vm68, %v62, 0
    %v73 = vsel %vm68, %v63, 0
    %75 = vmatprep.subr.mxu0 0.0
    %76 = vmatpush1.msra.mxu0 %v64
    %77 = vmatprep.subr.mxu0 0.0
    %78 = vmatpush1.msra.mxu0 %v65
    %79 = vmatprep.subr.mxu0 0.0
    %80 = vmatpush1.msra.mxu0 %v66
    %81 = vmatprep.subr.mxu0 0.0
    %82 = vmatpush1.msra.mxu0 %v67
    %83 = vmatprep.subr.mxu0 0.0
    %84 = vmatpush1.msra.mxu0 0.0
    %85 = vmatprep.subr.mxu0 0.0
    %86 = vmatpush1.msra.mxu0 0.0
    %87 = vmatprep.subr.mxu0 0.0
    %88 = vmatpush1.msra.mxu0 0.0
    %89 = vmatprep.subr.mxu0 0.0
    %90 = vmatpush1.msra.mxu0 0.0
    %91 = vmatprep.subr.mxu0 0.0
    %92 = vmatpush1.msra.mxu0 0.0
    %93 = vmatprep.subr.mxu0 0.0
    %94 = vmatpush1.msra.mxu0 0.0
    %95 = vmatprep.subr.mxu0 0.0
    %96 = vmatpush1.msra.mxu0 0.0
    %97 = vmatprep.subr.mxu0 0.0
    %98 = vmatpush1.msra.mxu0 0.0
    %99 = vmatprep.subr.mxu0 0.0
    %100 = vmatpush1.msra.mxu0 0.0
    %101 = vmatprep.subr.mxu0 0.0
    %102 = vmatpush1.msra.mxu0 0.0
    %103 = vmatprep.subr.mxu0 0.0
    %104 = vmatpush1.msra.mxu0 0.0
    %105 = vmatprep.subr.mxu0 0.0
    %106 = vmatpush1.msra.mxu0 0.0
    %107 = vmatprep.subr.mxu0 0.0
    %108 = vmatpush1.msra.mxu0 0.0
    %109 = vmatprep.subr.mxu0 0.0
    %110 = vmatpush1.msra.mxu0 0.0
    %111 = vmatprep.subr.mxu0 0.0
    %112 = vmatpush1.msra.mxu0 0.0
    %113 = vmatprep.subr.mxu0 0.0
    %114 = vmatpush1.msra.mxu0 0.0
    %115 = vmatprep.subr.mxu0 0.0
    %116 = vmatpush1.msra.mxu0 0.0
    %117 = vmatprep.subr.mxu0 0.0
    %118 = vmatpush1.msra.mxu0 0.0
    %119 = vmatprep.subr.mxu0 0.0
    %120 = vmatpush1.msra.mxu0 0.0
    %121 = vmatprep.subr.mxu0 0.0
    %122 = vmatpush1.msra.mxu0 0.0
    %123 = vmatprep.subr.mxu0 0.0
    %124 = vmatpush1.msra.mxu0 0.0
    %125 = vmatprep.subr.mxu0 0.0
    %126 = vmatpush1.msra.mxu0 0.0
    %127 = vmatprep.subr.mxu0 0.0
    %128 = vmatpush1.msra.mxu0 0.0
    %129 = vmatprep.subr.mxu0 0.0
    %130 = vmatpush1.msra.mxu0 0.0
    %131 = vmatprep.subr.mxu0 0.0
    %132 = vmatpush1.msra.mxu0 0.0
    %133 = vmatprep.subr.mxu0 0.0
    %134 = vmatpush1.msra.mxu0 0.0
    %135 = vmatprep.subr.mxu0 0.0
    %136 = vmatpush1.msra.mxu0 0.0
    %137 = vmatprep.subr.mxu0 0.0
    %138 = vmatpush1.msra.mxu0 0.0
    %139 = vmatprep.mubr.f32.mxu0 0.0
    %140 = vmatmul.mubr.f32.gmra.mrb[0].mxu0 %v70
    %v141 = vpop.f32.mrb[0].mxu0
    %v142 = vadd.f32 0.0, %v141
    %v143 = vpop.f32.mrb[0].mxu0
    %144 = vmatprep.mubr.f32.mxu0 0.0
    %145 = vmatmul.mubr.f32.gmra.mrb[0].mxu0 %v73
    %v146 = vpop.f32.mrb[0].mxu0
    %v147 = vadd.f32 0.0, %v146
    %v148 = vpop.f32.mrb[0].mxu0
    %149 = vdwg.mxu0
    %v150 = vxor.u32 %v142, 2147483648
    %v151 = vxor.u32 %v147, 2147483648
    %v152 = vmul.f32 %v150, 1.442695
    %v153 = vpow.pop %v152
    %v154 = vmul.f32 %v151, 1.442695
    %v155 = vpow.pop %v154
    %v156 = vadd.f32 %v153, 1.0
    %v157 = vadd.f32 %v155, 1.0
    %v158 = vrcp.pop %v156
    %v159 = vmul.f32 1.0, %v158
    %v160 = vrcp.pop %v157
    %v161 = vmul.f32 1.0, %v160
    %v162 = vmul.f32 %v142, %v159
    %v163 = vmul.f32 %v147, %v161
    %v164 = vsel %vm68, %v162, 0.0
    %165 = vadd.xlane.f32.xlu0 %v164
    %v166 = vpop.xlane.xlu0 %165
    %v167 = vsel %vm68, %v163, 0.0
    %168 = vadd.xlane.f32.xlu0 %v167
    %v169 = vpop.xlane.xlu0 %168
    %v170 = vmul.f32 %v166, 0.03125
    %v171 = vmul.f32 %v169, 0.03125
    %v172 = vmul.f32 %v162, %v162
    %v173 = vmul.f32 %v163, %v163
    %v174 = vsel %vm68, %v172, 0.0
    %175 = vadd.xlane.f32.xlu0 %v174
    %v176 = vpop.xlane.xlu0 %175
    %v177 = vsel %vm68, %v173, 0.0
    %178 = vadd.xlane.f32.xlu0 %v177
    %v179 = vpop.xlane.xlu0 %178
    %v180 = vmul.f32 %v176, 0.03125
    %v181 = vmul.f32 %v179, 0.03125
    %v182 = vmul.f32 %v170, %v170
    %v183 = vmul.f32 %v171, %v171
    %v184 = vsub.f32 %v180, %v182
    %v185 = vsub.f32 %v181, %v183
    %v186 = vmax.f32 %v184, 0.0
    %v187 = vmax.f32 %v185, 0.0
    %v188 = vsub.f32 %v162, %v170
    %v189 = vsub.f32 %v163, %v171
    %v190 = vadd.f32 %v186, 1e-05
    %v191 = vadd.f32 %v187, 1e-05
    %v192 = vrsqrt.pop %v190
    %v193 = vrsqrt.pop %v191
    %v194 = vmul.f32 %v188, %v192
    %v195 = vmul.f32 %v189, %v193
    %v196 = vld [vmem:[%s2] sm:$0x1]
    %v198 = vlaneseq
    %v199 = vshrl.u32 %v198, 7
    %v200 = vsub.s32 0, %v199
    %v201 = vrot.slane %v196, %v200
    %v203 = vmul.f32 %v194, %v201
    %v204 = vmul.f32 %v195, %v201
    %v205 = vld [vmem:[%s3] sm:$0x1]
    %v207 = vlaneseq
    %v208 = vshrl.u32 %v207, 7
    %v209 = vsub.s32 0, %v208
    %v210 = vrot.slane %v205, %v209
    %v212 = vadd.f32 %v203, %v210
    %v213 = vadd.f32 %v204, %v210
    %v214 = vld [vmem:[#allocation7] sm:$0xff]
    %v215 = vld [vmem:[#allocation7 + $0x8] sm:$0xff]
    %v216 = vld [vmem:[#allocation7 + $0x10] sm:$0xff]
    %v217 = vld [vmem:[#allocation7 + $0x18] sm:$0xff]
    %v219 = vsel %vm68, %v212, 0
    %v222 = vsel %vm68, %v213, 0
    %224 = vmatprep.subr.mxu0 0.0
    %225 = vmatpush1.msra.mxu0 %v214
    %226 = vmatprep.subr.mxu0 0.0
    %227 = vmatpush1.msra.mxu0 %v215
    %228 = vmatprep.subr.mxu0 0.0
    %229 = vmatpush1.msra.mxu0 %v216
    %230 = vmatprep.subr.mxu0 0.0
    %231 = vmatpush1.msra.mxu0 %v217
    %232 = vmatprep.subr.mxu0 0.0
    %233 = vmatpush1.msra.mxu0 0.0
    %234 = vmatprep.subr.mxu0 0.0
    %235 = vmatpush1.msra.mxu0 0.0
    %236 = vmatprep.subr.mxu0 0.0
    %237 = vmatpush1.msra.mxu0 0.0
    %238 = vmatprep.subr.mxu0 0.0
    %239 = vmatpush1.msra.mxu0 0.0
    %240 = vmatprep.subr.mxu0 0.0
    %241 = vmatpush1.msra.mxu0 0.0
    %242 = vmatprep.subr.mxu0 0.0
    %243 = vmatpush1.msra.mxu0 0.0
    %244 = vmatprep.subr.mxu0 0.0
    %245 = vmatpush1.msra.mxu0 0.0
    %246 = vmatprep.subr.mxu0 0.0
    %247 = vmatpush1.msra.mxu0 0.0
    %248 = vmatprep.subr.mxu0 0.0
    %249 = vmatpush1.msra.mxu0 0.0
    %250 = vmatprep.subr.mxu0 0.0
    %251 = vmatpush1.msra.mxu0 0.0
    %252 = vmatprep.subr.mxu0 0.0
    %253 = vmatpush1.msra.mxu0 0.0
    %254 = vmatprep.subr.mxu0 0.0
    %255 = vmatpush1.msra.mxu0 0.0
    %256 = vmatprep.subr.mxu0 0.0
    %257 = vmatpush1.msra.mxu0 0.0
    %258 = vmatprep.subr.mxu0 0.0
    %259 = vmatpush1.msra.mxu0 0.0
    %260 = vmatprep.subr.mxu0 0.0
    %261 = vmatpush1.msra.mxu0 0.0
    %262 = vmatprep.subr.mxu0 0.0
    %263 = vmatpush1.msra.mxu0 0.0
    %264 = vmatprep.subr.mxu0 0.0
    %265 = vmatpush1.msra.mxu0 0.0
    %266 = vmatprep.subr.mxu0 0.0
    %267 = vmatpush1.msra.mxu0 0.0
    %268 = vmatprep.subr.mxu0 0.0
    %269 = vmatpush1.msra.mxu0 0.0
    %270 = vmatprep.subr.mxu0 0.0
    %271 = vmatpush1.msra.mxu0 0.0
    %272 = vmatprep.subr.mxu0 0.0
    %273 = vmatpush1.msra.mxu0 0.0
    %274 = vmatprep.subr.mxu0 0.0
    %275 = vmatpush1.msra.mxu0 0.0
    %276 = vmatprep.subr.mxu0 0.0
    %277 = vmatpush1.msra.mxu0 0.0
    %278 = vmatprep.subr.mxu0 0.0
    %279 = vmatpush1.msra.mxu0 0.0
    %280 = vmatprep.subr.mxu0 0.0
    %281 = vmatpush1.msra.mxu0 0.0
    %282 = vmatprep.subr.mxu0 0.0
    %283 = vmatpush1.msra.mxu0 0.0
    %284 = vmatprep.subr.mxu0 0.0
    %285 = vmatpush1.msra.mxu0 0.0
    %286 = vmatprep.subr.mxu0 0.0
    %287 = vmatpush1.msra.mxu0 0.0
    %288 = vmatprep.mubr.f32.mxu0 0.0
    %289 = vmatmul.mubr.f32.gmra.mrb[0].mxu0 %v219
    %v290 = vpop.f32.mrb[0].mxu0
    %v291 = vadd.f32 0.0, %v290
    %v292 = vpop.f32.mrb[0].mxu0
    %293 = vmatprep.mubr.f32.mxu0 0.0
    %294 = vmatmul.mubr.f32.gmra.mrb[0].mxu0 %v222
    %v295 = vpop.f32.mrb[0].mxu0
    %v296 = vadd.f32 0.0, %v295
    %v297 = vpop.f32.mrb[0].mxu0
    %298 = vdwg.mxu0
    %299 = vst [vmem:[#allocation8] sm:$0xff] %v291
    %300 = vst [vmem:[#allocation8 + $0x8] sm:$0xff] %v296
    // Predicated region
    $region34: #{tpu_custom_call.1} parent=1 // pred_check
      _
    $region35: #{tpu_custom_call.1} parent=1 // pred_check_branch
      %302 = sbr.rel (0) target = $region37
    $region36: #{tpu_custom_call.1} parent=1 // pred_region
      %s304 = ssub.s32 256, 256
      %305 = vsyncadd [#allocation4], %s304
      %s306 = sshll.u32 [#allocation8], 4
      %s307 = int_to_ptr.vmem [resolvable:$true] %s306
      %312 = dma.vmem_to_hbm [thread:$0]  %s307, 256, %s5, [#allocation4], 128, 128, 8
    $region37: #{tpu_custom_call.1} parent=1 // pred_fallthru
      _
    // Predicated region
    $region38: #{tpu_custom_call.1} parent=1 // pred_check
      _
    $region39: #{tpu_custom_call.1} parent=1 // pred_check_branch
      %314 = sbr.rel (0) target = $region41
    $region40: #{tpu_custom_call.1} parent=1 // pred_region
      %315 = dma.done [#allocation4], 256
    $region41: #{tpu_custom_call.1} parent=1 // pred_fallthru
      _
    %316 = vsyncpa [#allocation3], 1
    %317 = vsyncpa [#allocation6], 1
    %318 = vsyncpa [#allocation4], 1

</llo_original>
